<compile_context>
chip_gen: v6e
topology: v6e:2x2x1
jax: 0.10.0
libtpu: 0.0.40
codegen_flags: <defaults>
</compile_context>

<pallas_src>
import jax
import jax.numpy as jnp
from jax.experimental import pallas as pl
from jax.experimental.pallas import tpu as pltpu


def _conv_bn_relu_kernel(xm_ref, xt_ref, xb_ref, w_ref, scale_ref, bias_ref,
                         o_ref):
    # xm_ref    : (TH, W, Cin)  bf16  main rows of the (un-padded) strip
    # xt_ref    : (1,  W, Cin)  bf16  row just above the strip (zeroed on strip 0)
    # xb_ref    : (1,  W, Cin)  bf16  row just below the strip (zeroed on last strip)
    # w_ref     : (9*Cin, CP)   bf16  3x3 weights flattened as (dy, dx, cin); CP = pad128(Cout)
    # scale_ref : (1, CP)       f32   folded BN scale = gamma / sqrt(var+eps)   (0 in pad)
    # bias_ref  : (1, CP)       f32   folded BN bias  = beta - mean * scale     (0 in pad)
    # o_ref     : (TH*W, Cout)  bf16  un-padded, channel-minor output strip
    th, w, cin = xm_ref.shape
    cout = o_ref.shape[-1]
    i = pl.program_id(1)
    last = pl.num_programs(1) - 1

    # Halo rows: the clamped index_maps always fetch a valid row; zero it here
    # when the strip touches the top/bottom image border (pad=1 semantics).
    xm = xm_ref[...].astype(jnp.bfloat16)
    top = xt_ref[...].astype(jnp.bfloat16)
    bot = xb_ref[...].astype(jnp.bfloat16)
    top = jnp.where(i > 0, top, jnp.zeros_like(top))
    bot = jnp.where(i < last, bot, jnp.zeros_like(bot))

    rows = jnp.concatenate([top, xm, bot], axis=0)          # (TH+2, W,   Cin)
    # Left/right zero columns added in VMEM instead of padding the tensor in HBM.
    zcol = jnp.zeros((th + 2, 1, cin), jnp.bfloat16)
    strip = jnp.concatenate([zcol, rows, zcol], axis=1)     # (TH+2, W+2, Cin)

    # im2col: fold the 9 shifted taps into one (TH*W, 9*Cin) bf16 patch matrix
    # -> single K = 9*Cin MXU push; accumulation stays f32.
    taps = [strip[dy:dy + th, dx:dx + w, :]
            for dy in range(3) for dx in range(3)]          # 9 x (TH, W, Cin)
    patches = jnp.concatenate(taps, axis=-1).reshape(th * w, 9 * cin)

    acc = jnp.dot(patches, w_ref[...],
                  preferred_element_type=jnp.float32)       # (TH*W, CP) f32

    # Fused BatchNorm (eval-mode folded affine) + ReLU in f32, then store only
    # the real Cout channels as bf16 (padded lanes are compute-only).
    y = jnp.maximum(acc * scale_ref[...] + bias_ref[...], 0.0)
    o_ref[...] = y[:, :cout].astype(o_ref.dtype)


def _pick_strip_h(h, w, n, *, max_strip_pixels=8192, min_grid_steps=8):
    """Pick the strip height TH (rows per grid step).

    Rules:
      * TH must divide H.
      * Output block second-minor dim is TH*W -> require (TH*W) % 16 == 0
        (bf16 sublane granule) or TH == H (full-dim block is always legal).
      * Keep TH*W under `max_strip_pixels` (VMEM budget; default sized for
        v7x's 64 MiB VMEM -- raise to ~16-32K pixels on v5e/v6e's 128 MiB).
      * Among qualifying strips prefer the largest one that still yields at
        least `min_grid_steps` grid steps (keeps v7x's 2 TensorCores and the
        DMA pipeline busy); if none can, take the largest strip so tiny
        feature maps are not over-split into per-step overhead.
    """
    legal = [th for th in range(1, h + 1)
             if h % th == 0 and ((th * w) % 16 == 0 or th == h)]
    # `legal` is never empty: th == h always qualifies.
    under = [th for th in legal if th * w <= max_strip_pixels]
    pool = under if under else [min(legal)]   # guard: smallest legal footprint
    enough = [th for th in pool if n * (h // th) >= min_grid_steps]
    return max(enough) if enough else max(pool)


def conv_bn_relu(x_nchw, weight_oihw, gamma, beta, running_mean, running_var,
                 eps=1e-5, *, out_dtype=jnp.bfloat16,
                 max_strip_pixels=8192, vmem_limit_bytes=48 * 1024 * 1024):
    """Fused Conv2d(3x3, s=1, p=1, no bias) + BatchNorm2d(eval) + ReLU."""
    n, cin, h, w = x_nchw.shape
    cout, cin_w, kh, kw = weight_oihw.shape
    assert (cin_w, kh, kw) == (cin, 3, 3), "only k=3, s=1, p=1 implemented"

    # NHWC + bf16, fused into one boundary op (read f32 once, write bf16 once).
    # TODO(synk): in a full network keep activations NHWC/bf16 so this boundary
    # transpose and the one on the output disappear.
    x = jnp.transpose(x_nchw, (0, 2, 3, 1)).astype(jnp.bfloat16)

    cp = 128 * ((cout + 127) // 128)      # lane-dense Cout pad (VMEM-only)
    # OIHW -> (kh, kw, cin, cout) -> (9*Cin, Cout) -> pad Cout to 128k, bf16.
    wmat = jnp.transpose(weight_oihw, (2, 3, 1, 0)).reshape(9 * cin, cout)
    wmat = jnp.pad(wmat, ((0, 0), (0, cp - cout))).astype(jnp.bfloat16)

    scale = (gamma / jnp.sqrt(running_var + eps)).astype(jnp.float32)
    bias = (beta - running_mean * scale).astype(jnp.float32)
    scale_p = jnp.pad(scale, (0, cp - cout)).reshape(1, cp)
    bias_p = jnp.pad(bias, (0, cp - cout)).reshape(1, cp)

    th = _pick_strip_h(h, w, n, max_strip_pixels=max_strip_pixels)
    n_strips = h // th

    out_flat = pl.pallas_call(
        _conv_bn_relu_kernel,
        out_shape=jax.ShapeDtypeStruct((n, h * w, cout), out_dtype),
        grid_spec=pl.GridSpec(
            grid=(n, n_strips),
            in_specs=[
                # Main TH rows of the strip (non-overlapping blocks).
                pl.BlockSpec((None, th, w, cin),
                             lambda b, i: (b, i, 0, 0)),
                # 1-row halo just above the strip (clamped at the top edge;
                # zeroed in-kernel on strip 0).
                pl.BlockSpec((None, 1, w, cin),
                             lambda b, i: (b, jnp.maximum(i * th - 1, 0), 0, 0)),
                # 1-row halo just below the strip (clamped at the bottom edge;
                # zeroed in-kernel on the last strip).
                pl.BlockSpec((None, 1, w, cin),
                             lambda b, i: (b, jnp.minimum((i + 1) * th, h - 1),
                                           0, 0)),
                # Weights / folded BN affine: same block for every grid step.
                pl.BlockSpec((9 * cin, cp), lambda b, i: (0, 0)),
                pl.BlockSpec((1, cp), lambda b, i: (0, 0)),
                pl.BlockSpec((1, cp), lambda b, i: (0, 0)),
            ],
            out_specs=pl.BlockSpec((None, th * w, cout),
                                   lambda b, i: (b, i, 0)),
        ),
        compiler_params=pltpu.CompilerParams(
            dimension_semantics=("parallel", "parallel"),
            # Sized for v7x's 64 MiB VMEM; bump to 64-96 MiB on v5e/v6e together
            # with a larger max_strip_pixels for more HBM-roofline headroom.
            vmem_limit_bytes=vmem_limit_bytes),
    )(x, x, x, wmat, scale_p, bias_p)

    out = out_flat.reshape(n, h, w, cout)
    return jnp.transpose(out, (0, 3, 1, 2))               # back to NCHW (bf16)


def reference(x_nchw, weight_oihw, gamma, beta, rm, rv, eps=1e-5):
    y = jax.lax.conv_general_dilated(
        x_nchw, weight_oihw, window_strides=(1, 1),
        padding=((1, 1), (1, 1)),
        dimension_numbers=("NCHW", "OIHW", "NCHW"))
    scale = gamma / jnp.sqrt(rv + eps)
    bias = beta - rm * scale
    y = y * scale[None, :, None, None] + bias[None, :, None, None]
    return jnp.maximum(y, 0.0)


if __name__ == "__main__":
    # Small shapes consistent with the module: batch=2, in_ch=4, out_ch=8, 16x16.
    n, cin, cout, h, w = 2, 4, 8, 16, 16

    key = jax.random.PRNGKey(0)
    kx, kw_, kg, kb, km, kv = jax.random.split(key, 6)

    x = jax.random.normal(kx, (n, cin, h, w), dtype=jnp.float32)
    weight = jax.random.normal(kw_, (cout, cin, 3, 3), dtype=jnp.float32) * 0.1
    gamma = 1.0 + 0.1 * jax.random.normal(kg, (cout,), dtype=jnp.float32)
    beta = 0.1 * jax.random.normal(kb, (cout,), dtype=jnp.float32)
    running_mean = 0.1 * jax.random.normal(km, (cout,), dtype=jnp.float32)
    running_var = jax.random.uniform(kv, (cout,), dtype=jnp.float32,
                                     minval=0.5, maxval=1.5)

    # The kernel feeds the MXU bf16 activations/weights and stores bf16, so
    # compare against a reference computed from the same bf16-rounded inputs
    # with a tolerance that covers the final bf16 output rounding.
    x_q = x.astype(jnp.bfloat16).astype(jnp.float32)
    w_q = weight.astype(jnp.bfloat16).astype(jnp.float32)

    out = conv_bn_relu(x_q, w_q, gamma, beta, running_mean, running_var)
    out = jax.block_until_ready(out)
    ref = reference(x_q, w_q, gamma, beta, running_mean, running_var)

    assert out.shape == (n, cout, h, w), out.shape
    assert out.dtype == jnp.bfloat16, out.dtype
    out_f32 = out.astype(jnp.float32)
    max_err = float(jnp.max(jnp.abs(out_f32 - ref)))
    assert jnp.allclose(out_f32, ref, atol=3e-2, rtol=3e-2), max_err

    print("KERNEL_OK")
</pallas_src>

<mosaic_0001>
module attributes {stable_mosaic.version = 11 : i64} {
  func.func @_conv_bn_relu_kernel(%arg0: i32, %arg1: i32, %arg2: memref<1x4x16x4xbf16, #tpu.memory_space<vmem>>, %arg3: memref<1x1x16x4xbf16, #tpu.memory_space<vmem>>, %arg4: memref<1x1x16x4xbf16, #tpu.memory_space<vmem>>, %arg5: memref<36x128xbf16, #tpu.memory_space<vmem>>, %arg6: memref<1x128xf32, #tpu.memory_space<vmem>>, %arg7: memref<1x128xf32, #tpu.memory_space<vmem>>, %arg8: memref<1x64x8xbf16, #tpu.memory_space<vmem>>) attributes {dimension_semantics = [#tpu.dimension_semantics<parallel>, #tpu.dimension_semantics<parallel>], iteration_bounds = array<i64: 2, 4>, scalar_prefetch = 0 : i64, scratch_operands = 0 : i64, tpu.core_type = #tpu.core_type<tc>, window_params = [{transform_indices = @transform_0, window_bounds = array<i64: 1, 4, 16, 4>}, {transform_indices = @transform_1, window_bounds = array<i64: 1, 1, 16, 4>}, {transform_indices = @transform_2, window_bounds = array<i64: 1, 1, 16, 4>}, {pipeline_mode = #tpu.pipeline_mode<synchronous>, transform_indices = @transform_3, window_bounds = array<i64: 36, 128>}, {pipeline_mode = #tpu.pipeline_mode<synchronous>, transform_indices = @transform_4, window_bounds = array<i64: 1, 128>}, {pipeline_mode = #tpu.pipeline_mode<synchronous>, transform_indices = @transform_5, window_bounds = array<i64: 1, 128>}, {transform_indices = @transform_6, window_bounds = array<i64: 1, 64, 8>}]} {
    %c0 = arith.constant 0 : index
    %c0_0 = arith.constant 0 : index
    %c0_1 = arith.constant 0 : index
    %c0_2 = arith.constant 0 : index
    %0 = vector.load %arg2[%c0, %c0_0, %c0_1, %c0_2] : memref<1x4x16x4xbf16, #tpu.memory_space<vmem>>, vector<1x4x16x4xbf16>
    %1 = vector.shape_cast %0 : vector<1x4x16x4xbf16> to vector<4x16x4xbf16>
    %c0_3 = arith.constant 0 : index
    %c0_4 = arith.constant 0 : index
    %c0_5 = arith.constant 0 : index
    %c0_6 = arith.constant 0 : index
    %2 = vector.load %arg3[%c0_3, %c0_4, %c0_5, %c0_6] : memref<1x1x16x4xbf16, #tpu.memory_space<vmem>>, vector<1x1x16x4xbf16>
    %3 = vector.shape_cast %2 : vector<1x1x16x4xbf16> to vector<1x16x4xbf16>
    %c0_7 = arith.constant 0 : index
    %c0_8 = arith.constant 0 : index
    %c0_9 = arith.constant 0 : index
    %c0_10 = arith.constant 0 : index
    %4 = vector.load %arg4[%c0_7, %c0_8, %c0_9, %c0_10] : memref<1x1x16x4xbf16, #tpu.memory_space<vmem>>, vector<1x1x16x4xbf16>
    %5 = vector.shape_cast %4 : vector<1x1x16x4xbf16> to vector<1x16x4xbf16>
    %c0_i32 = arith.constant 0 : i32
    %6 = arith.cmpi sgt, %arg1, %c0_i32 : i32
    %cst = arith.constant 0.000000e+00 : bf16
    %7 = vector.broadcast %cst : bf16 to vector<1x16x4xbf16>
    %8 = arith.select %6, %3, %7 : vector<1x16x4xbf16>
    %c3_i32 = arith.constant 3 : i32
    %9 = arith.cmpi slt, %arg1, %c3_i32 : i32
    %cst_11 = arith.constant 0.000000e+00 : bf16
    %10 = vector.broadcast %cst_11 : bf16 to vector<1x16x4xbf16>
    %11 = arith.select %9, %5, %10 : vector<1x16x4xbf16>
    %12 = tpu.concatenate %8, %1, %11 in 0 : vector<1x16x4xbf16>, vector<4x16x4xbf16>, vector<1x16x4xbf16> -> vector<6x16x4xbf16>
    %cst_12 = arith.constant 0.000000e+00 : bf16
    %13 = vector.broadcast %cst_12 : bf16 to vector<6x1x4xbf16>
    %14 = tpu.concatenate %13, %12, %13 in 1 : vector<6x1x4xbf16>, vector<6x16x4xbf16>, vector<6x1x4xbf16> -> vector<6x18x4xbf16>
    %15 = vector.extract_strided_slice %14 {offsets = [0, 0, 0], sizes = [4, 16, 4], strides = [1, 1, 1]} : vector<6x18x4xbf16> to vector<4x16x4xbf16>
    %16 = vector.extract_strided_slice %14 {offsets = [0, 1, 0], sizes = [4, 16, 4], strides = [1, 1, 1]} : vector<6x18x4xbf16> to vector<4x16x4xbf16>
    %17 = vector.extract_strided_slice %14 {offsets = [0, 2, 0], sizes = [4, 16, 4], strides = [1, 1, 1]} : vector<6x18x4xbf16> to vector<4x16x4xbf16>
    %18 = vector.extract_strided_slice %14 {offsets = [1, 0, 0], sizes = [4, 16, 4], strides = [1, 1, 1]} : vector<6x18x4xbf16> to vector<4x16x4xbf16>
    %19 = vector.extract_strided_slice %14 {offsets = [1, 1, 0], sizes = [4, 16, 4], strides = [1, 1, 1]} : vector<6x18x4xbf16> to vector<4x16x4xbf16>
    %20 = vector.extract_strided_slice %14 {offsets = [1, 2, 0], sizes = [4, 16, 4], strides = [1, 1, 1]} : vector<6x18x4xbf16> to vector<4x16x4xbf16>
    %21 = vector.extract_strided_slice %14 {offsets = [2, 0, 0], sizes = [4, 16, 4], strides = [1, 1, 1]} : vector<6x18x4xbf16> to vector<4x16x4xbf16>
    %22 = vector.extract_strided_slice %14 {offsets = [2, 1, 0], sizes = [4, 16, 4], strides = [1, 1, 1]} : vector<6x18x4xbf16> to vector<4x16x4xbf16>
    %23 = vector.extract_strided_slice %14 {offsets = [2, 2, 0], sizes = [4, 16, 4], strides = [1, 1, 1]} : vector<6x18x4xbf16> to vector<4x16x4xbf16>
    %24 = tpu.concatenate %15, %16, %17, %18, %19, %20, %21, %22, %23 in 2 : vector<4x16x4xbf16>, vector<4x16x4xbf16>, vector<4x16x4xbf16>, vector<4x16x4xbf16>, vector<4x16x4xbf16>, vector<4x16x4xbf16>, vector<4x16x4xbf16>, vector<4x16x4xbf16>, vector<4x16x4xbf16> -> vector<4x16x36xbf16>
    %25 = vector.shape_cast %24 : vector<4x16x36xbf16> to vector<64x36xbf16>
    %c0_13 = arith.constant 0 : index
    %c0_14 = arith.constant 0 : index
    %26 = vector.load %arg5[%c0_13, %c0_14] : memref<36x128xbf16, #tpu.memory_space<vmem>>, vector<36x128xbf16>
    %cst_15 = arith.constant dense<0.000000e+00> : vector<64x128xf32>
    %27 = tpu.matmul %25, %26, %cst_15 {dimension_numbers = #tpu.dot_dimension_numbers<[1], [0], [0], [1], [0, 0, 1, 1], [], []>} : vector<64x36xbf16>, vector<36x128xbf16>, vector<64x128xf32> -> vector<64x128xf32>
    %c0_16 = arith.constant 0 : index
    %c0_17 = arith.constant 0 : index
    %28 = vector.load %arg6[%c0_16, %c0_17] : memref<1x128xf32, #tpu.memory_space<vmem>>, vector<1x128xf32>
    %29 = vector.broadcast %28 : vector<1x128xf32> to vector<64x128xf32>
    %30 = arith.mulf %27, %29 : vector<64x128xf32>
    %c0_18 = arith.constant 0 : index
    %c0_19 = arith.constant 0 : index
    %31 = vector.load %arg7[%c0_18, %c0_19] : memref<1x128xf32, #tpu.memory_space<vmem>>, vector<1x128xf32>
    %32 = vector.broadcast %31 : vector<1x128xf32> to vector<64x128xf32>
    %33 = arith.addf %30, %32 : vector<64x128xf32>
    %cst_20 = arith.constant 0.000000e+00 : f32
    %34 = vector.broadcast %cst_20 : f32 to vector<64x128xf32>
    %35 = arith.maximumf %33, %34 : vector<64x128xf32>
    %36 = vector.extract_strided_slice %35 {offsets = [0, 0], sizes = [64, 8], strides = [1, 1]} : vector<64x128xf32> to vector<64x8xf32>
    %37 = arith.truncf %36 : vector<64x8xf32> to vector<64x8xbf16>
    %c0_21 = arith.constant 0 : index
    %c0_22 = arith.constant 0 : index
    %c0_23 = arith.constant 0 : index
    %38 = vector.load %arg8[%c0_21, %c0_22, %c0_23] : memref<1x64x8xbf16, #tpu.memory_space<vmem>>, vector<1x64x8xbf16>
    %39 = vector.shape_cast %38 : vector<1x64x8xbf16> to vector<64x8xbf16>
    %40 = vector.shape_cast %37 : vector<64x8xbf16> to vector<1x64x8xbf16>
    tpu.vector_store %arg8[%c0_21, %c0_22, %c0_23], %40 {strides = array<i32>} : memref<1x64x8xbf16, #tpu.memory_space<vmem>>, vector<1x64x8xbf16>,
    return
  }
  func.func @transform_0(%arg0: i32, %arg1: i32) -> (i32, i32, i32, i32) {
    %c0_i32 = arith.constant 0 : i32
    %c0_i32_0 = arith.constant 0 : i32
    %c0_i32_1 = arith.constant 0 : i32
    return %arg0, %arg1, %c0_i32, %c0_i32_0 : i32, i32, i32, i32
  }
  func.func @transform_1(%arg0: i32, %arg1: i32) -> (i32, i32, i32, i32) {
    %c4_i32 = arith.constant 4 : i32
    %0 = arith.muli %arg1, %c4_i32 : i32
    %c1_i32 = arith.constant 1 : i32
    %1 = arith.subi %0, %c1_i32 : i32
    %c0_i32 = arith.constant 0 : i32
    %2 = arith.maxsi %1, %c0_i32 : i32
    %c0_i32_0 = arith.constant 0 : i32
    %c0_i32_1 = arith.constant 0 : i32
    %c0_i32_2 = arith.constant 0 : i32
    return %arg0, %2, %c0_i32_0, %c0_i32_1 : i32, i32, i32, i32
  }
  func.func @transform_2(%arg0: i32, %arg1: i32) -> (i32, i32, i32, i32) {
    %c1_i32 = arith.constant 1 : i32
    %0 = arith.addi %arg1, %c1_i32 : i32
    %c4_i32 = arith.constant 4 : i32
    %1 = arith.muli %0, %c4_i32 : i32
    %c15_i32 = arith.constant 15 : i32
    %2 = arith.minsi %1, %c15_i32 : i32
    %c0_i32 = arith.constant 0 : i32
    %c0_i32_0 = arith.constant 0 : i32
    %c0_i32_1 = arith.constant 0 : i32
    return %arg0, %2, %c0_i32, %c0_i32_0 : i32, i32, i32, i32
  }
  func.func @transform_3(%arg0: i32, %arg1: i32) -> (i32, i32) {
    %c0_i32 = arith.constant 0 : i32
    %c0_i32_0 = arith.constant 0 : i32
    %c0_i32_1 = arith.constant 0 : i32
    return %c0_i32, %c0_i32_0 : i32, i32
  }
  func.func @transform_4(%arg0: i32, %arg1: i32) -> (i32, i32) {
    %c0_i32 = arith.constant 0 : i32
    %c0_i32_0 = arith.constant 0 : i32
    %c0_i32_1 = arith.constant 0 : i32
    return %c0_i32, %c0_i32_0 : i32, i32
  }
  func.func @transform_5(%arg0: i32, %arg1: i32) -> (i32, i32) {
    %c0_i32 = arith.constant 0 : i32
    %c0_i32_0 = arith.constant 0 : i32
    %c0_i32_1 = arith.constant 0 : i32
    return %c0_i32, %c0_i32_0 : i32, i32
  }
  func.func @transform_6(%arg0: i32, %arg1: i32) -> (i32, i32, i32) {
    %c0_i32 = arith.constant 0 : i32
    %c0_i32_0 = arith.constant 0 : i32
    return %arg0, %arg1, %c0_i32 : i32, i32, i32
  }
}

</mosaic_0001>

<llo_original>
// kernel: tpu_custom_call.1
$region0: #{tpu_custom_call.1}
  #allocation0 [shape = 'u32[]', space=smem, size = 0x4, offset = 0x4, fixed_abs, tag = 'smem constant byte address 0x4 - core index']
  #allocation1 [shape = 'u32[144,128]{1,0:T(1,128)}', space=vmem, size = 0x12000, scoped, tag = 'internal scratch']
  %s0 = inlined_call_operand.vmem [shape: bf16[2,16,16,4], index: 0, kind: input, shape index: {}]
  %s1 = inlined_call_operand.vmem [shape: bf16[2,16,16,4], index: 1, kind: input, shape index: {}]
  %s2 = inlined_call_operand.vmem [shape: bf16[2,16,16,4], index: 2, kind: input, shape index: {}]
  %s3 = inlined_call_operand.vmem [shape: bf16[36,128], index: 3, kind: input, shape index: {}]
  %s4 = inlined_call_operand.vmem [shape: f32[1,128], index: 4, kind: input, shape index: {}]
  %s5 = inlined_call_operand.vmem [shape: f32[1,128], index: 5, kind: input, shape index: {}]
  %s6 = inlined_call_operand.vmem [shape: bf16[2,256,8], index: 6, kind: output, shape index: {}]
  %s7 = sld [smem:[#allocation0]]
  $region57: #{tpu_custom_call.1} parent=0
    _
  %s9 = ssub.s32 1, %s7
  %s10 = scalar_select 0, %s9, %s7
  loop: start=0, step=1, limit=10
  $region2: #{tpu_custom_call.1} parent=0 // loop_pre_header
    _
  $region3: #{tpu_custom_call.1} parent=0 // loop_header
    %s12 = sphi 0, %s16
    %p13 = scmp.ge.s32.totalorder %s12, 10
    %s19 = sphi 0, %s31
    %s20 = sphi 0, %s27
    %s21 = sphi 0, %s19
    %s22 = sphi 0, %s20
    %s23 = sphi 0, %s21
    %s24 = sphi 0, %s22
    %s36 = sphi 0, %s38
    %s39 = sphi 0, %s36
    %s40 = sphi 0, %s39
    %s56 = sphi 0, %s40
    %s72 = sphi 0, %s74
    %s75 = sphi 0, %s72
    %s76 = sphi 0, %s75
    %s92 = sphi 0, %s76
    %s108 = sphi 0, %s110
    %s111 = sphi 0, %s108
    %s112 = sphi 0, %s111
    %s128 = sphi 0, %s112
    %s132 = sphi 0, %s132
    %s134 = sphi 0, %s132
    %s135 = sphi 0, %s134
    %s149 = sphi 0, %s135
    %s153 = sphi 0, %s153
    %s155 = sphi 0, %s153
    %s156 = sphi 0, %s155
    %s170 = sphi 0, %s156
    %s174 = sphi 0, %s174
    %s176 = sphi 0, %s174
    %s177 = sphi 0, %s176
    %s191 = sphi 0, %s177
    %s199 = sphi 0, %s201
    %s202 = sphi 0, %s199
    %s203 = sphi 0, %s202
    %s219 = sphi 0, %s203
  $region4: #{tpu_custom_call.1} parent=0 // loop_header_branch
    %15 = sbr.rel (%p13) target = $region8
  $region5: #{tpu_custom_call.1} parent=0 // loop_body
    %s17 = ssub.s32 %s12, 1
    %s18 = ssub.s32 %s12, 2
    %s25 = sadd.s32 1, %s20
    %p26 = scmp.ge.s32.totalorder %s25, 4
    %s27 = scalar_select %p26, 0, %s25
    %s28 = sadd.s32 1, %s19
    %s29 = scalar_select %p26, %s28, %s19
    %p30 = scmp.ge.s32.totalorder %s29, 2
    %s31 = scalar_select %p30, 0, %s29
    %s32 = ssub.s32 %s19, %s31
    %s33 = ssub.s32 %s20, %s27
    %s34 = sor.u32 %s32, %s33
    %p35 = scmp.eq.s32.totalorder %s34, 0
    %s37 = sadd.s32 %s36, 1
    %s38 = scalar_select %p35, %s36, %s37
    %p41 = pneg %p35
    %p42 = scmp.eq.s32.totalorder %s12, 7
    %p43 = por %p41, %p42
    %p44 = scmp.ne.s32.totalorder %s36, %s39
    %p45 = scmp.eq.s32.totalorder %s12, 0
    %p46 = por %p44, %p45
    %p47 = scmp.ne.s32.totalorder %s36, %s39
    %p48 = scmp.eq.s32.totalorder %s17, 7
    %p49 = por %p47, %p48
    %p50 = scmp.ne.s32.totalorder %s39, %s40
    %p51 = scmp.eq.s32.totalorder %s17, 0
    %p52 = por %p50, %p51
    %p53 = scmp.ne.s32.totalorder %s39, %s40
    %p54 = scmp.eq.s32.totalorder %s18, 7
    %p55 = por %p53, %p54
    %p57 = scmp.ne.s32.totalorder %s40, %s56
    %p58 = scmp.eq.s32.totalorder %s18, 0
    %p59 = por %p57, %p58
    %s60 = smul.u32 %s20, 4
    %s61 = ssub.s32 %s60, 1
    %p62 = scmp.gt.s32.totalorder %s61, 0
    %s63 = scalar_select %p62, %s61, 0
    %s64 = smul.u32 %s27, 4
    %s65 = ssub.s32 %s64, 1
    %p66 = scmp.gt.s32.totalorder %s65, 0
    %s67 = scalar_select %p66, %s65, 0
    %s68 = ssub.s32 %s19, %s31
    %s69 = ssub.s32 %s63, %s67
    %s70 = sor.u32 %s68, %s69
    %p71 = scmp.eq.s32.totalorder %s70, 0
    %s73 = sadd.s32 %s72, 1
    %s74 = scalar_select %p71, %s72, %s73
    %p77 = pneg %p71
    %p78 = scmp.eq.s32.totalorder %s12, 7
    %p79 = por %p77, %p78
    %p80 = scmp.ne.s32.totalorder %s72, %s75
    %p81 = scmp.eq.s32.totalorder %s12, 0
    %p82 = por %p80, %p81
    %p83 = scmp.ne.s32.totalorder %s72, %s75
    %p84 = scmp.eq.s32.totalorder %s17, 7
    %p85 = por %p83, %p84
    %p86 = scmp.ne.s32.totalorder %s75, %s76
    %p87 = scmp.eq.s32.totalorder %s17, 0
    %p88 = por %p86, %p87
    %p89 = scmp.ne.s32.totalorder %s75, %s76
    %p90 = scmp.eq.s32.totalorder %s18, 7
    %p91 = por %p89, %p90
    %p93 = scmp.ne.s32.totalorder %s76, %s92
    %p94 = scmp.eq.s32.totalorder %s18, 0
    %p95 = por %p93, %p94
    %s96 = sadd.s32 %s20, 1
    %s97 = smul.u32 %s96, 4
    %p98 = scmp.lt.s32.totalorder %s97, 15
    %s99 = scalar_select %p98, %s97, 15
    %s100 = sadd.s32 %s27, 1
    %s101 = smul.u32 %s100, 4
    %p102 = scmp.lt.s32.totalorder %s101, 15
    %s103 = scalar_select %p102, %s101, 15
    %s104 = ssub.s32 %s19, %s31
    %s105 = ssub.s32 %s99, %s103
    %s106 = sor.u32 %s104, %s105
    %p107 = scmp.eq.s32.totalorder %s106, 0
    %s109 = sadd.s32 %s108, 1
    %s110 = scalar_select %p107, %s108, %s109
    %p113 = pneg %p107
    %p114 = scmp.eq.s32.totalorder %s12, 7
    %p115 = por %p113, %p114
    %p116 = scmp.ne.s32.totalorder %s108, %s111
    %p117 = scmp.eq.s32.totalorder %s12, 0
    %p118 = por %p116, %p117
    %p119 = scmp.ne.s32.totalorder %s108, %s111
    %p120 = scmp.eq.s32.totalorder %s17, 7
    %p121 = por %p119, %p120
    %p122 = scmp.ne.s32.totalorder %s111, %s112
    %p123 = scmp.eq.s32.totalorder %s17, 0
    %p124 = por %p122, %p123
    %p125 = scmp.ne.s32.totalorder %s111, %s112
    %p126 = scmp.eq.s32.totalorder %s18, 7
    %p127 = por %p125, %p126
    %p129 = scmp.ne.s32.totalorder %s112, %s128
    %p130 = scmp.eq.s32.totalorder %s18, 0
    %p131 = por %p129, %p130
    %s133 = sadd.s32 %s132, 1
    %p136 = scmp.eq.s32.totalorder %s12, 7
    %p137 = scmp.ne.s32.totalorder %s132, %s134
    %p138 = scmp.eq.s32.totalorder %s12, 0
    %p139 = por %p137, %p138
    %p140 = scmp.ne.s32.totalorder %s132, %s134
    %p141 = scmp.eq.s32.totalorder %s17, 7
    %p142 = por %p140, %p141
    %p143 = scmp.ne.s32.totalorder %s134, %s135
    %p144 = scmp.eq.s32.totalorder %s17, 0
    %p145 = por %p143, %p144
    %p146 = scmp.ne.s32.totalorder %s134, %s135
    %p147 = scmp.eq.s32.totalorder %s18, 7
    %p148 = por %p146, %p147
    %p150 = scmp.ne.s32.totalorder %s135, %s149
    %p151 = scmp.eq.s32.totalorder %s18, 0
    %p152 = por %p150, %p151
    %s154 = sadd.s32 %s153, 1
    %p157 = scmp.eq.s32.totalorder %s12, 7
    %p158 = scmp.ne.s32.totalorder %s153, %s155
    %p159 = scmp.eq.s32.totalorder %s12, 0
    %p160 = por %p158, %p159
    %p161 = scmp.ne.s32.totalorder %s153, %s155
    %p162 = scmp.eq.s32.totalorder %s17, 7
    %p163 = por %p161, %p162
    %p164 = scmp.ne.s32.totalorder %s155, %s156
    %p165 = scmp.eq.s32.totalorder %s17, 0
    %p166 = por %p164, %p165
    %p167 = scmp.ne.s32.totalorder %s155, %s156
    %p168 = scmp.eq.s32.totalorder %s18, 7
    %p169 = por %p167, %p168
    %p171 = scmp.ne.s32.totalorder %s156, %s170
    %p172 = scmp.eq.s32.totalorder %s18, 0
    %p173 = por %p171, %p172
    %s175 = sadd.s32 %s174, 1
    %p178 = scmp.eq.s32.totalorder %s12, 7
    %p179 = scmp.ne.s32.totalorder %s174, %s176
    %p180 = scmp.eq.s32.totalorder %s12, 0
    %p181 = por %p179, %p180
    %p182 = scmp.ne.s32.totalorder %s174, %s176
    %p183 = scmp.eq.s32.totalorder %s17, 7
    %p184 = por %p182, %p183
    %p185 = scmp.ne.s32.totalorder %s176, %s177
    %p186 = scmp.eq.s32.totalorder %s17, 0
    %p187 = por %p185, %p186
    %p188 = scmp.ne.s32.totalorder %s176, %s177
    %p189 = scmp.eq.s32.totalorder %s18, 7
    %p190 = por %p188, %p189
    %p192 = scmp.ne.s32.totalorder %s177, %s191
    %p193 = scmp.eq.s32.totalorder %s18, 0
    %p194 = por %p192, %p193
    %s195 = ssub.s32 %s19, %s31
    %s196 = ssub.s32 %s20, %s27
    %s197 = sor.u32 %s195, %s196
    %p198 = scmp.eq.s32.totalorder %s197, 0
    %s200 = sadd.s32 %s199, 1
    %s201 = scalar_select %p198, %s199, %s200
    %p204 = pneg %p198
    %p205 = scmp.eq.s32.totalorder %s12, 7
    %p206 = por %p204, %p205
    %p207 = scmp.ne.s32.totalorder %s199, %s202
    %p208 = scmp.eq.s32.totalorder %s12, 0
    %p209 = por %p207, %p208
    %p210 = scmp.ne.s32.totalorder %s199, %s202
    %p211 = scmp.eq.s32.totalorder %s17, 7
    %p212 = por %p210, %p211
    %p213 = scmp.ne.s32.totalorder %s202, %s203
    %p214 = scmp.eq.s32.totalorder %s17, 0
    %p215 = por %p213, %p214
    %p216 = scmp.ne.s32.totalorder %s202, %s203
    %p217 = scmp.eq.s32.totalorder %s18, 7
    %p218 = por %p216, %p217
    %p220 = scmp.ne.s32.totalorder %s203, %s219
    %p221 = scmp.eq.s32.totalorder %s18, 0
    %p222 = por %p220, %p221
    %p223 = scmp.le.s32.totalorder 1, %s12
    %p224 = scmp.lt.s32.totalorder %s12, 9
    %p225 = pnand %p223, %p224
    %p226 = pneg %p225
    // Predicated region
    $region9: #{tpu_custom_call.1} parent=5 // pred_check
      _
    $region10: #{tpu_custom_call.1} parent=5 // pred_check_branch
      %228 = sbr.rel (%p225) target = $region12
    $region11: #{tpu_custom_call.1} parent=5 // pred_region
      %s229 = ssub.s32 %s12, 1
      // Predicated region
      $region13: #{tpu_custom_call.1} parent=11 // pred_check
        %p230 = pneg %p145
      $region14: #{tpu_custom_call.1} parent=11 // pred_check_branch
        %232 = sbr.rel (%p230) target = $region16
      $region15: #{tpu_custom_call.1} parent=11 // pred_region
        _
      $region16: #{tpu_custom_call.1} parent=11 // pred_fallthru
        _
      // Predicated region
      $region17: #{tpu_custom_call.1} parent=11 // pred_check
        %p233 = pneg %p166
      $region18: #{tpu_custom_call.1} parent=11 // pred_check_branch
        %235 = sbr.rel (%p233) target = $region20
      $region19: #{tpu_custom_call.1} parent=11 // pred_region
        _
      $region20: #{tpu_custom_call.1} parent=11 // pred_fallthru
        _
      // Predicated region
      $region21: #{tpu_custom_call.1} parent=11 // pred_check
        %p236 = pneg %p187
      $region22: #{tpu_custom_call.1} parent=11 // pred_check_branch
        %238 = sbr.rel (%p236) target = $region24
      $region23: #{tpu_custom_call.1} parent=11 // pred_region
        _
      $region24: #{tpu_custom_call.1} parent=11 // pred_fallthru
        _
    $region12: #{tpu_custom_call.1} parent=5 // pred_fallthru
      _
    %p239 = scmp.lt.s32.totalorder %s12, 8
    // Predicated region
    $region25: #{tpu_custom_call.1} parent=5 // pred_check
      %p240 = pneg %p239
    $region26: #{tpu_custom_call.1} parent=5 // pred_check_branch
      %242 = sbr.rel (%p240) target = $region28
    $region27: #{tpu_custom_call.1} parent=5 // pred_region
      // Predicated region
      $region29: #{tpu_custom_call.1} parent=27 // pred_check
        %p243 = pneg %p46
      $region30: #{tpu_custom_call.1} parent=27 // pred_check_branch
        %245 = sbr.rel (%p243) target = $region32
      $region31: #{tpu_custom_call.1} parent=27 // pred_region
        %s246 = smul.u32 4, %s20
        %p247 = scmp.lt.s32.totalorder %s19, 1
        %s248 = scalar_select %p247, %s19, 1
        %p249 = scmp.lt.s32.totalorder %s246, 15
        %s250 = scalar_select %p249, %s246, 15
        %s251 = smul.addr %s250, 2
        %s252 = smul.addr %s248, 32
        %s253 = sadd.s32 %s251, %s252
        %s254 = smul.addr %s253, 4
        %s255 = scalar_lea.vmem %s0, %s254
        %s256 = smul.u32 4, %s20
      $region32: #{tpu_custom_call.1} parent=27 // pred_fallthru
        _
      // Predicated region
      $region33: #{tpu_custom_call.1} parent=27 // pred_check
        %p257 = pneg %p82
      $region34: #{tpu_custom_call.1} parent=27 // pred_check_branch
        %259 = sbr.rel (%p257) target = $region36
      $region35: #{tpu_custom_call.1} parent=27 // pred_region
        %s260 = smul.u32 %s20, 4
        %s261 = ssub.s32 %s260, 1
        %p262 = scmp.gt.s32.totalorder %s261, 0
        %s263 = scalar_select %p262, %s261, 0
        %p264 = scmp.lt.s32.totalorder %s19, 1
        %s265 = scalar_select %p264, %s19, 1
        %p266 = scmp.lt.s32.totalorder %s263, 15
        %s267 = scalar_select %p266, %s263, 15
        %s268 = smul.addr %s267, 2
        %s269 = smul.addr %s265, 32
        %s270 = sadd.s32 %s268, %s269
        %s271 = smul.addr %s270, 4
        %s272 = scalar_lea.vmem %s1, %s271
        %s273 = smul.u32 %s20, 4
        %s274 = ssub.s32 %s273, 1
        %p275 = scmp.gt.s32.totalorder %s274, 0
        %s276 = scalar_select %p275, %s274, 0
      $region36: #{tpu_custom_call.1} parent=27 // pred_fallthru
        _
      // Predicated region
      $region37: #{tpu_custom_call.1} parent=27 // pred_check
        %p277 = pneg %p118
      $region38: #{tpu_custom_call.1} parent=27 // pred_check_branch
        %279 = sbr.rel (%p277) target = $region40
      $region39: #{tpu_custom_call.1} parent=27 // pred_region
        %s280 = sadd.s32 %s20, 1
        %s281 = smul.u32 %s280, 4
        %p282 = scmp.lt.s32.totalorder %s281, 15
        %s283 = scalar_select %p282, %s281, 15
        %p284 = scmp.lt.s32.totalorder %s19, 1
        %s285 = scalar_select %p284, %s19, 1
        %p286 = scmp.lt.s32.totalorder %s283, 15
        %s287 = scalar_select %p286, %s283, 15
        %s288 = smul.addr %s287, 2
        %s289 = smul.addr %s285, 32
        %s290 = sadd.s32 %s288, %s289
        %s291 = smul.addr %s290, 4
        %s292 = scalar_lea.vmem %s2, %s291
        %s293 = sadd.s32 %s20, 1
        %s294 = smul.u32 %s293, 4
        %p295 = scmp.lt.s32.totalorder %s294, 15
        %s296 = scalar_select %p295, %s294, 15
      $region40: #{tpu_custom_call.1} parent=27 // pred_fallthru
        _
    $region28: #{tpu_custom_call.1} parent=5 // pred_fallthru
      _
    %p297 = scmp.le.s32.totalorder 1, %s12
    %p298 = scmp.lt.s32.totalorder %s12, 9
    %p299 = pnand %p297, %p298
    %p300 = pneg %p299
    // Predicated region
    $region41: #{tpu_custom_call.1} parent=5 // pred_check
      _
    $region42: #{tpu_custom_call.1} parent=5 // pred_check_branch
      %302 = sbr.rel (%p299) target = $region44
    $region43: #{tpu_custom_call.1} parent=5 // pred_region
      %s303 = ssub.s32 %s12, 1
      %s304 = smul.u32 4, %s22
      %p305 = scmp.lt.s32.totalorder %s21, 1
      %s306 = scalar_select %p305, %s21, 1
      %p307 = scmp.lt.s32.totalorder %s304, 15
      %s308 = scalar_select %p307, %s304, 15
      %s309 = smul.addr %s308, 2
      %s310 = smul.addr %s306, 32
      %s311 = sadd.s32 %s309, %s310
      %s312 = smul.addr %s311, 4
      %s313 = scalar_lea.vmem %s0, %s312
      %p314 = pneg %p52
      %p315 = pneg %p49
      %s316 = smul.u32 %s22, 4
      %s317 = ssub.s32 %s316, 1
      %p318 = scmp.gt.s32.totalorder %s317, 0
      %s319 = scalar_select %p318, %s317, 0
      %p320 = scmp.lt.s32.totalorder %s21, 1
      %s321 = scalar_select %p320, %s21, 1
      %p322 = scmp.lt.s32.totalorder %s319, 15
      %s323 = scalar_select %p322, %s319, 15
      %s324 = smul.addr %s323, 2
      %s325 = smul.addr %s321, 32
      %s326 = sadd.s32 %s324, %s325
      %s327 = smul.addr %s326, 4
      %s328 = scalar_lea.vmem %s1, %s327
      %p329 = pneg %p88
      %p330 = pneg %p85
      %s331 = sadd.s32 %s22, 1
      %s332 = smul.u32 %s331, 4
      %p333 = scmp.lt.s32.totalorder %s332, 15
      %s334 = scalar_select %p333, %s332, 15
      %p335 = scmp.lt.s32.totalorder %s21, 1
      %s336 = scalar_select %p335, %s21, 1
      %p337 = scmp.lt.s32.totalorder %s334, 15
      %s338 = scalar_select %p337, %s334, 15
      %s339 = smul.addr %s338, 2
      %s340 = smul.addr %s336, 32
      %s341 = sadd.s32 %s339, %s340
      %s342 = smul.addr %s341, 4
      %s343 = scalar_lea.vmem %s2, %s342
      %p344 = pneg %p124
      %p345 = pneg %p121
      %p346 = pneg %p145
      %p347 = pneg %p142
      %p348 = pneg %p166
      %p349 = pneg %p163
      %p350 = pneg %p187
      %p351 = pneg %p184
      %p352 = pneg %p215
      %p353 = pneg %p212
      %s354 = smul.u32 8, %s22
      %p355 = scmp.lt.s32.totalorder %s21, 1
      %s356 = scalar_select %p355, %s21, 1
      %p357 = scmp.lt.s32.totalorder %s354, 31
      %s358 = scalar_select %p357, %s354, 31
      %s359 = smul.addr %s356, 32
      %s360 = sadd.s32 %s358, %s359
      %s361 = smul.addr %s360, 4
      %s362 = scalar_lea.vmem %s6, %s361
      %s363 = smul.u32 4, %s22
      %p364 = scmp.lt.s32.totalorder %s21, 1
      %s365 = scalar_select %p364, %s21, 1
      %p366 = scmp.lt.s32.totalorder %s363, 15
      %s367 = scalar_select %p366, %s363, 15
      %s368 = smul.addr %s367, 2
      %s369 = smul.addr %s365, 32
      %s370 = sadd.s32 %s368, %s369
      %s371 = smul.addr %s370, 4
      %s372 = scalar_lea.vmem %s0, %s371
      %s373 = smul.u32 4, %s22
      %s374 = smul.u32 %s22, 4
      %s375 = ssub.s32 %s374, 1
      %p376 = scmp.gt.s32.totalorder %s375, 0
      %s377 = scalar_select %p376, %s375, 0
      %p378 = scmp.lt.s32.totalorder %s21, 1
      %s379 = scalar_select %p378, %s21, 1
      %p380 = scmp.lt.s32.totalorder %s377, 15
      %s381 = scalar_select %p380, %s377, 15
      %s382 = smul.addr %s381, 2
      %s383 = smul.addr %s379, 32
      %s384 = sadd.s32 %s382, %s383
      %s385 = smul.addr %s384, 4
      %s386 = scalar_lea.vmem %s1, %s385
      %s387 = smul.u32 %s22, 4
      %s388 = ssub.s32 %s387, 1
      %p389 = scmp.gt.s32.totalorder %s388, 0
      %s390 = scalar_select %p389, %s388, 0
      %s391 = sadd.s32 %s22, 1
      %s392 = smul.u32 %s391, 4
      %p393 = scmp.lt.s32.totalorder %s392, 15
      %s394 = scalar_select %p393, %s392, 15
      %p395 = scmp.lt.s32.totalorder %s21, 1
      %s396 = scalar_select %p395, %s21, 1
      %p397 = scmp.lt.s32.totalorder %s394, 15
      %s398 = scalar_select %p397, %s394, 15
      %s399 = smul.addr %s398, 2
      %s400 = smul.addr %s396, 32
      %s401 = sadd.s32 %s399, %s400
      %s402 = smul.addr %s401, 4
      %s403 = scalar_lea.vmem %s2, %s402
      %s404 = sadd.s32 %s22, 1
      %s405 = smul.u32 %s404, 4
      %p406 = scmp.lt.s32.totalorder %s405, 15
      %s407 = scalar_select %p406, %s405, 15
      %s408 = smul.u32 8, %s22
      %p409 = scmp.lt.s32.totalorder %s21, 1
      %s410 = scalar_select %p409, %s21, 1
      %p411 = scmp.lt.s32.totalorder %s408, 31
      %s412 = scalar_select %p411, %s408, 31
      %s413 = smul.addr %s410, 32
      %s414 = sadd.s32 %s412, %s413
      %s415 = smul.addr %s414, 4
      %s416 = scalar_lea.vmem %s6, %s415
      %s417 = smul.u32 8, %s22
      %v419 = vld [vmem:[%s372] sm:$0xf]
      %v420 = vld [vmem:[%s372 + $0x4] sm:$0xf]
      %v421 = vld [vmem:[%s372 + $0x8] sm:$0xf]
      %v422 = vld [vmem:[%s372 + $0xc] sm:$0xf]
      %v423 = vld [vmem:[%s372 + $0x10] sm:$0xf]
      %v424 = vld [vmem:[%s372 + $0x14] sm:$0xf]
      %v425 = vld [vmem:[%s372 + $0x18] sm:$0xf]
      %v426 = vld [vmem:[%s372 + $0x1c] sm:$0xf]
      %v427 = vld [vmem:[%s386] sm:$0xf]
      %v428 = vld [vmem:[%s386 + $0x4] sm:$0xf]
      %v429 = vld [vmem:[%s403] sm:$0xf]
      %v430 = vld [vmem:[%s403 + $0x4] sm:$0xf]
      %p431 = scmp.gt.s32.totalorder %s22, 0
      %s432 = scalar_select %p431, 1, 0
      %v433 = vstv %s432
      %vm434 = vcmp.eq.s32.totalorder %v433, 1
      %v435 = vsel %vm434, %v427, 0
      %v436 = vsel %vm434, %v428, 0
      %p437 = scmp.lt.s32.totalorder %s22, 3
      %s438 = scalar_select %p437, 1, 0
      %v439 = vstv %s438
      %vm440 = vcmp.eq.s32.totalorder %v439, 1
      %v441 = vsel %vm440, %v429, 0
      %v442 = vsel %vm440, %v430, 0
      %v455 = vunpack.c.l.b16 %v435
      %v456 = vunpack.c.l.b16 %v436
      %v457 = vunpack.c.l.b16 %v419
      %v458 = vunpack.c.l.b16 %v420
      %v459 = vunpack.c.l.b16 %v421
      %v460 = vunpack.c.l.b16 %v422
      %v461 = vunpack.c.l.b16 %v423
      %v462 = vunpack.c.l.b16 %v424
      %v463 = vunpack.c.l.b16 %v425
      %v464 = vunpack.c.l.b16 %v426
      %v465 = vunpack.c.l.b16 %v441
      %v466 = vunpack.c.l.b16 %v442
      %v467 = vpack.c.b16 %v456, %v455
      %v468 = vpack.c.b16 %v458, %v457
      %v469 = vpack.c.b16 %v460, %v459
      %v470 = vpack.c.b16 %v462, %v461
      %v471 = vpack.c.b16 %v464, %v463
      %v472 = vpack.c.b16 %v466, %v465
      %v474 = vshrl.u32 %v467, 16
      %v476 = vrot.slane %v474, 7
      %v477 = vshll.u32 %v467, 16
      %v479 = vor.u32 %v476, %v477
      %v481 = vshrl.u32 %v468, 16
      %v483 = vrot.slane %v481, 7
      %v484 = vshll.u32 %v468, 16
      %v486 = vor.u32 %v483, %v484
      %v488 = vshrl.u32 %v469, 16
      %v490 = vrot.slane %v488, 7
      %v491 = vshll.u32 %v469, 16
      %v493 = vor.u32 %v490, %v491
      %v495 = vshrl.u32 %v470, 16
      %v497 = vrot.slane %v495, 7
      %v498 = vshll.u32 %v470, 16
      %v500 = vor.u32 %v497, %v498
      %v502 = vshrl.u32 %v471, 16
      %v504 = vrot.slane %v502, 7
      %v505 = vshll.u32 %v471, 16
      %v507 = vor.u32 %v504, %v505
      %v509 = vshrl.u32 %v472, 16
      %v511 = vrot.slane %v509, 7
      %v512 = vshll.u32 %v472, 16
      %v514 = vor.u32 %v511, %v512
      %vm527 = vcmask 1040384
      %vm528 = vsmask.f32 256
      %vm529 = vmand %vm527, %vm528
      %v530 = vsel %vm529, 0, %v479
      %v531 = vsel %vm529, 0, %v486
      %v532 = vsel %vm529, 0, %v493
      %v533 = vsel %vm529, 0, %v500
      %v534 = vsel %vm529, 0, %v507
      %v535 = vsel %vm529, 0, %v514
      %v536 = vsel %vm529, %v476, 0
      %v537 = vsel %vm529, %v483, 0
      %v538 = vsel %vm529, %v490, 0
      %v539 = vsel %vm529, %v497, 0
      %v540 = vsel %vm529, %v504, 0
      %v541 = vsel %vm529, %v511, 0
      %vm542 = vsmask.f32 7424
      %v544 = vshrl.u32 %v530, 16
      %v546 = vshll.u32 %v530, 16
      %v548 = vrot.slane %v546, 1
      %v549 = vor.u32 %v544, %v548
      %v551 = vshll.u32 %v536, 16
      %v553 = vrot.slane %v551, 1
      %v554 = vsel %vm542, %v549, %v553
      %v556 = vshrl.u32 %v531, 16
      %v558 = vshll.u32 %v531, 16
      %v560 = vrot.slane %v558, 1
      %v561 = vor.u32 %v556, %v560
      %v563 = vshll.u32 %v537, 16
      %v565 = vrot.slane %v563, 1
      %v566 = vsel %vm542, %v561, %v565
      %v568 = vshrl.u32 %v532, 16
      %v570 = vshll.u32 %v532, 16
      %v572 = vrot.slane %v570, 1
      %v573 = vor.u32 %v568, %v572
      %v575 = vshll.u32 %v538, 16
      %v577 = vrot.slane %v575, 1
      %v578 = vsel %vm542, %v573, %v577
      %v580 = vshrl.u32 %v533, 16
      %v582 = vshll.u32 %v533, 16
      %v584 = vrot.slane %v582, 1
      %v585 = vor.u32 %v580, %v584
      %v587 = vshll.u32 %v539, 16
      %v589 = vrot.slane %v587, 1
      %v590 = vsel %vm542, %v585, %v589
      %591 = vrot.lane.b32.xlu0 %v554, 4
      %v592 = vpop.permute.xlu0 %591
      %593 = vrot.lane.b32.xlu0 %v566, 4
      %v594 = vpop.permute.xlu0 %593
      %595 = vrot.lane.b32.xlu0 %v578, 4
      %v596 = vpop.permute.xlu0 %595
      %597 = vrot.lane.b32.xlu0 %v590, 4
      %v598 = vpop.permute.xlu0 %597
      %vm607 = vcmask 1046528
      %v608 = vrot.slane %v530, 1
      %v609 = vrot.slane %v536, 1
      %v610 = vsel %vm607, %v608, %v609
      %v611 = vrot.slane %v531, 1
      %v612 = vrot.slane %v537, 1
      %v613 = vsel %vm607, %v611, %v612
      %v614 = vrot.slane %v532, 1
      %v615 = vrot.slane %v538, 1
      %v616 = vsel %vm607, %v614, %v615
      %v617 = vrot.slane %v533, 1
      %v618 = vrot.slane %v539, 1
      %v619 = vsel %vm607, %v617, %v618
      %620 = vrot.lane.b32.xlu0 %v610, 8
      %v621 = vpop.permute.xlu0 %620
      %622 = vrot.lane.b32.xlu0 %v613, 8
      %v623 = vpop.permute.xlu0 %622
      %624 = vrot.lane.b32.xlu0 %v616, 8
      %v625 = vpop.permute.xlu0 %624
      %626 = vrot.lane.b32.xlu0 %v619, 8
      %v627 = vpop.permute.xlu0 %626
      %629 = vrot.lane.b32.xlu0 %v531, 12
      %v630 = vpop.permute.xlu0 %629
      %631 = vrot.lane.b32.xlu0 %v532, 12
      %v632 = vpop.permute.xlu0 %631
      %633 = vrot.lane.b32.xlu0 %v533, 12
      %v634 = vpop.permute.xlu0 %633
      %635 = vrot.lane.b32.xlu0 %v534, 12
      %v636 = vpop.permute.xlu0 %635
      %v638 = vshrl.u32 %v534, 16
      %v640 = vshll.u32 %v534, 16
      %v642 = vrot.slane %v640, 1
      %v643 = vor.u32 %v638, %v642
      %v645 = vshll.u32 %v540, 16
      %v647 = vrot.slane %v645, 1
      %v648 = vsel %vm542, %v643, %v647
      %649 = vrot.lane.b32.xlu0 %v566, 16
      %v650 = vpop.permute.xlu0 %649
      %651 = vrot.lane.b32.xlu0 %v578, 16
      %v652 = vpop.permute.xlu0 %651
      %653 = vrot.lane.b32.xlu0 %v590, 16
      %v654 = vpop.permute.xlu0 %653
      %655 = vrot.lane.b32.xlu0 %v648, 16
      %v656 = vpop.permute.xlu0 %655
      %v658 = vrot.slane %v534, 1
      %v659 = vrot.slane %v540, 1
      %v660 = vsel %vm607, %v658, %v659
      %661 = vrot.lane.b32.xlu0 %v613, 20
      %v662 = vpop.permute.xlu0 %661
      %663 = vrot.lane.b32.xlu0 %v616, 20
      %v664 = vpop.permute.xlu0 %663
      %665 = vrot.lane.b32.xlu0 %v619, 20
      %v666 = vpop.permute.xlu0 %665
      %667 = vrot.lane.b32.xlu0 %v660, 20
      %v668 = vpop.permute.xlu0 %667
      %670 = vrot.lane.b32.xlu0 %v532, 24
      %v671 = vpop.permute.xlu0 %670
      %672 = vrot.lane.b32.xlu0 %v533, 24
      %v673 = vpop.permute.xlu0 %672
      %674 = vrot.lane.b32.xlu0 %v534, 24
      %v675 = vpop.permute.xlu0 %674
      %676 = vrot.lane.b32.xlu0 %v535, 24
      %v677 = vpop.permute.xlu0 %676
      %v679 = vshrl.u32 %v535, 16
      %v681 = vshll.u32 %v535, 16
      %v683 = vrot.slane %v681, 1
      %v684 = vor.u32 %v679, %v683
      %v686 = vshll.u32 %v541, 16
      %v688 = vrot.slane %v686, 1
      %v689 = vsel %vm542, %v684, %v688
      %690 = vrot.lane.b32.xlu0 %v578, 28
      %v691 = vpop.permute.xlu0 %690
      %692 = vrot.lane.b32.xlu0 %v590, 28
      %v693 = vpop.permute.xlu0 %692
      %694 = vrot.lane.b32.xlu0 %v648, 28
      %v695 = vpop.permute.xlu0 %694
      %696 = vrot.lane.b32.xlu0 %v689, 28
      %v697 = vpop.permute.xlu0 %696
      %v699 = vrot.slane %v535, 1
      %v700 = vrot.slane %v541, 1
      %v701 = vsel %vm607, %v699, %v700
      %702 = vrot.lane.b32.xlu0 %v616, 32
      %v703 = vpop.permute.xlu0 %702
      %704 = vrot.lane.b32.xlu0 %v619, 32
      %v705 = vpop.permute.xlu0 %704
      %706 = vrot.lane.b32.xlu0 %v660, 32
      %v707 = vpop.permute.xlu0 %706
      %708 = vrot.lane.b32.xlu0 %v701, 32
      %v709 = vpop.permute.xlu0 %708
      %vm710 = vcmask 31744
      %v712 = vsel %vm710, %v530, %v592
      %v714 = vsel %vm710, %v531, %v594
      %v716 = vsel %vm710, %v532, %v596
      %v718 = vsel %vm710, %v533, %v598
      %vm719 = vcmask 64512
      %v721 = vsel %vm719, %v712, %v621
      %v723 = vsel %vm719, %v714, %v623
      %v725 = vsel %vm719, %v716, %v625
      %v727 = vsel %vm719, %v718, %v627
      %vm728 = vcmask 97280
      %v730 = vsel %vm728, %v721, %v630
      %v732 = vsel %vm728, %v723, %v632
      %v734 = vsel %vm728, %v725, %v634
      %v736 = vsel %vm728, %v727, %v636
      %vm737 = vcmask 130048
      %v739 = vsel %vm737, %v730, %v650
      %v741 = vsel %vm737, %v732, %v652
      %v743 = vsel %vm737, %v734, %v654
      %v745 = vsel %vm737, %v736, %v656
      %vm746 = vcmask 162816
      %v748 = vsel %vm746, %v739, %v662
      %v750 = vsel %vm746, %v741, %v664
      %v752 = vsel %vm746, %v743, %v666
      %v754 = vsel %vm746, %v745, %v668
      %vm755 = vcmask 195584
      %v757 = vsel %vm755, %v748, %v671
      %v759 = vsel %vm755, %v750, %v673
      %v761 = vsel %vm755, %v752, %v675
      %v763 = vsel %vm755, %v754, %v677
      %vm764 = vcmask 228352
      %v766 = vsel %vm764, %v757, %v691
      %v768 = vsel %vm764, %v759, %v693
      %v770 = vsel %vm764, %v761, %v695
      %v772 = vsel %vm764, %v763, %v697
      %vm773 = vcmask 261120
      %v775 = vsel %vm773, %v766, %v703
      %v777 = vsel %vm773, %v768, %v705
      %v779 = vsel %vm773, %v770, %v707
      %v781 = vsel %vm773, %v772, %v709
      %v782 = vld [vmem:[%s3] sm:$0xf]
      %v783 = vld [vmem:[%s3 + $0x4] sm:$0xf]
      %v784 = vld [vmem:[%s3 + $0x8] sm:$0xf]
      %v785 = vld [vmem:[%s3 + $0xc] sm:$0xf]
      %v786 = vld [vmem:[%s3 + $0x10] sm:$0x3]
      %v792 = vunpack.c.l.b16 %v782
      %v793 = vunpack.c.l.b16 %v783
      %v794 = vunpack.c.l.b16 %v784
      %v795 = vunpack.c.l.b16 %v785
      %v796 = vunpack.c.l.b16 %v786
      %v797 = vpack.c.b16 %v793, %v792
      %v798 = vpack.c.b16 %v795, %v794
      %v799 = vpack.c.b16 %v796, %v796
      %vm802 = vcmask 293888
      %v803 = vsel %vm802, %v775, 0
      %v805 = vsel %vm802, %v777, 0
      %v807 = vsel %vm802, %v779, 0
      %v809 = vsel %vm802, %v781, 0
      %vm811 = vcmask 1041408
      %v813 = vsel %vm811, %v799, 0
      %815 = vmatprep.subr.bf16.mxu0 0
      %816 = vmatpush1.bf16.msra.mxu0 0
      %817 = vmatprep.subr.bf16.mxu0 0
      %818 = vmatpush1.bf16.msra.mxu0 0
      %819 = vmatprep.subr.bf16.mxu0 0
      %820 = vmatpush1.bf16.msra.mxu0 0
      %821 = vmatprep.subr.bf16.mxu0 0
      %822 = vmatpush1.bf16.msra.mxu0 0
      %823 = vmatprep.subr.bf16.mxu0 0
      %824 = vmatpush1.bf16.msra.mxu0 0
      %825 = vmatprep.subr.bf16.mxu0 0
      %826 = vmatpush1.bf16.msra.mxu0 %v813
      %827 = vmatprep.subr.bf16.mxu0 0
      %828 = vmatpush1.bf16.msra.mxu0 %v798
      %829 = vmatprep.subr.bf16.mxu0 0
      %830 = vmatpush1.bf16.msra.mxu0 %v797
      %831 = vmatprep.subr.bf16.mxu0 0
      %832 = vmatpush2.bf16.msra.mxu0 0
      %833 = vmatprep.subr.bf16.mxu0 0
      %834 = vmatpush2.bf16.msra.mxu0 0
      %835 = vmatprep.subr.bf16.mxu0 0
      %836 = vmatpush2.bf16.msra.mxu0 0
      %837 = vmatprep.subr.bf16.mxu0 0
      %838 = vmatpush2.bf16.msra.mxu0 0
      %839 = vmatprep.subr.bf16.mxu0 0
      %840 = vmatpush2.bf16.msra.mxu0 0
      %841 = vmatprep.subr.bf16.mxu0 0
      %842 = vmatpush2.bf16.msra.mxu0 0
      %843 = vmatprep.subr.bf16.mxu0 0
      %844 = vmatpush2.bf16.msra.mxu0 0
      %845 = vmatprep.subr.bf16.mxu0 0
      %846 = vmatpush2.bf16.msra.mxu0 0
      %847 = vmatprep.mubr.bf16.mxu0 0
      %848 = vmatmul.mubr.bf16.gmra.mxu0 %v803
      %v849 = vpop.f32.mrf.mxu0
      %v850 = vadd.f32 0.0, %v849
      %v851 = vpop.f32.mrf.mxu0
      %v852 = vpop.f32.mrf.mxu0
      %v853 = vadd.f32 0.0, %v852
      %v854 = vpop.f32.mrf.mxu0
      %855 = vmatprep.mubr.bf16.mxu0 0
      %856 = vmatmul.mubr.bf16.gmra.mxu0 %v805
      %v857 = vpop.f32.mrf.mxu0
      %v858 = vadd.f32 0.0, %v857
      %v859 = vpop.f32.mrf.mxu0
      %v860 = vpop.f32.mrf.mxu0
      %v861 = vadd.f32 0.0, %v860
      %v862 = vpop.f32.mrf.mxu0
      %863 = vmatprep.mubr.bf16.mxu0 0
      %864 = vmatmul.mubr.bf16.gmra.mxu0 %v807
      %v865 = vpop.f32.mrf.mxu0
      %v866 = vadd.f32 0.0, %v865
      %v867 = vpop.f32.mrf.mxu0
      %v868 = vpop.f32.mrf.mxu0
      %v869 = vadd.f32 0.0, %v868
      %v870 = vpop.f32.mrf.mxu0
      %871 = vmatprep.mubr.bf16.mxu0 0
      %872 = vmatmul.mubr.bf16.gmra.mxu0 %v809
      %v873 = vpop.f32.mrf.mxu0
      %v874 = vadd.f32 0.0, %v873
      %v875 = vpop.f32.mrf.mxu0
      %v876 = vpop.f32.mrf.mxu0
      %v877 = vadd.f32 0.0, %v876
      %v878 = vpop.f32.mrf.mxu0
      %879 = vdwg.mxu0
      %v880 = vld [vmem:[%s4] sm:$0x1]
      %v882 = vlaneseq
      %v883 = vshrl.u32 %v882, 7
      %v884 = vsub.s32 0, %v883
      %v885 = vrot.slane %v880, %v884
      %v887 = vmul.f32 %v850, %v885
      %v888 = vmul.f32 %v853, %v885
      %v889 = vmul.f32 %v858, %v885
      %v890 = vmul.f32 %v861, %v885
      %v891 = vmul.f32 %v866, %v885
      %v892 = vmul.f32 %v869, %v885
      %v893 = vmul.f32 %v874, %v885
      %v894 = vmul.f32 %v877, %v885
      %v895 = vld [vmem:[%s5] sm:$0x1]
      %v897 = vlaneseq
      %v898 = vshrl.u32 %v897, 7
      %v899 = vsub.s32 0, %v898
      %v900 = vrot.slane %v895, %v899
      %v902 = vadd.f32 %v887, %v900
      %v903 = vadd.f32 %v888, %v900
      %v904 = vadd.f32 %v889, %v900
      %v905 = vadd.f32 %v890, %v900
      %v906 = vadd.f32 %v891, %v900
      %v907 = vadd.f32 %v892, %v900
      %v908 = vadd.f32 %v893, %v900
      %v909 = vadd.f32 %v894, %v900
      %v910 = vmax.f32 %v902, 0.0
      %v911 = vmax.f32 %v903, 0.0
      %v912 = vmax.f32 %v904, 0.0
      %v913 = vmax.f32 %v905, 0.0
      %v914 = vmax.f32 %v906, 0.0
      %v915 = vmax.f32 %v907, 0.0
      %v916 = vmax.f32 %v908, 0.0
      %v917 = vmax.f32 %v909, 0.0
      %v918 = vpack.c.bf16 %v911, %v910
      %v919 = vpack.c.bf16 %v913, %v912
      %v920 = vpack.c.bf16 %v915, %v914
      %v921 = vpack.c.bf16 %v917, %v916
      %v926 = vunpack.c.l.b16 %v918
      %v927 = vunpack.c.h.b16 %v918
      %v928 = vunpack.c.l.b16 %v919
      %v929 = vunpack.c.h.b16 %v919
      %v930 = vunpack.c.l.b16 %v920
      %v931 = vunpack.c.h.b16 %v920
      %v932 = vunpack.c.l.b16 %v921
      %v933 = vunpack.c.h.b16 %v921
      %v934 = vpack.c.b16 %v926, %v926
      %v935 = vpack.c.b16 %v927, %v927
      %v936 = vpack.c.b16 %v928, %v928
      %v937 = vpack.c.b16 %v929, %v929
      %v938 = vpack.c.b16 %v930, %v930
      %v939 = vpack.c.b16 %v931, %v931
      %v940 = vpack.c.b16 %v932, %v932
      %v941 = vpack.c.b16 %v933, %v933
      %vm950 = vcmask 60416
      %951 = vst.msk [vmem:[%s416] sm:$0xf] %vm950, %v934
      %952 = vst.msk [vmem:[%s416 + $0x4] sm:$0xf] %vm950, %v935
      %953 = vst.msk [vmem:[%s416 + $0x8] sm:$0xf] %vm950, %v936
      %954 = vst.msk [vmem:[%s416 + $0xc] sm:$0xf] %vm950, %v937
      %955 = vst.msk [vmem:[%s416 + $0x10] sm:$0xf] %vm950, %v938
      %956 = vst.msk [vmem:[%s416 + $0x14] sm:$0xf] %vm950, %v939
      %957 = vst.msk [vmem:[%s416 + $0x18] sm:$0xf] %vm950, %v940
      %958 = vst.msk [vmem:[%s416 + $0x1c] sm:$0xf] %vm950, %v941
      %s959 = smul.u32 8, %s22
      %p960 = scmp.lt.s32.totalorder %s21, 1
      %s961 = scalar_select %p960, %s21, 1
      %p962 = scmp.lt.s32.totalorder %s959, 31
      %s963 = scalar_select %p962, %s959, 31
      %s964 = smul.addr %s961, 32
      %s965 = sadd.s32 %s963, %s964
      %s966 = smul.addr %s965, 4
      %s967 = scalar_lea.vmem %s6, %s966
      // Predicated region
      $region45: #{tpu_custom_call.1} parent=43 // pred_check
        %p968 = pneg %p212
      $region46: #{tpu_custom_call.1} parent=43 // pred_check_branch
        %970 = sbr.rel (%p968) target = $region48
      $region47: #{tpu_custom_call.1} parent=43 // pred_region
        %s971 = smul.u32 8, %s22
      $region48: #{tpu_custom_call.1} parent=43 // pred_fallthru
        _
    $region44: #{tpu_custom_call.1} parent=5 // pred_fallthru
      _
    %p972 = scmp.le.s32.totalorder 2, %s12
    // Predicated region
    $region49: #{tpu_custom_call.1} parent=5 // pred_check
      %p973 = pneg %p972
    $region50: #{tpu_custom_call.1} parent=5 // pred_check_branch
      %975 = sbr.rel (%p973) target = $region52
    $region51: #{tpu_custom_call.1} parent=5 // pred_region
      %s976 = ssub.s32 %s12, 2
      // Predicated region
      $region53: #{tpu_custom_call.1} parent=51 // pred_check
        %p977 = pneg %p218
      $region54: #{tpu_custom_call.1} parent=51 // pred_check_branch
        %979 = sbr.rel (%p977) target = $region56
      $region55: #{tpu_custom_call.1} parent=51 // pred_region
        %s980 = smul.u32 8, %s24
        %p981 = scmp.lt.s32.totalorder %s23, 1
        %s982 = scalar_select %p981, %s23, 1
        %p983 = scmp.lt.s32.totalorder %s980, 31
        %s984 = scalar_select %p983, %s980, 31
        %s985 = smul.addr %s982, 32
        %s986 = sadd.s32 %s984, %s985
        %s987 = smul.addr %s986, 4
        %s988 = scalar_lea.vmem %s6, %s987
      $region56: #{tpu_custom_call.1} parent=51 // pred_fallthru
        _
    $region52: #{tpu_custom_call.1} parent=5 // pred_fallthru
      _
  $region6: #{tpu_custom_call.1} parent=0 // loop_footer
    %s16 = sadd.s32 1, %s12
  $region7: #{tpu_custom_call.1} parent=0 // loop_footer_branch
    %11 = sbr.rel target = $region3
  $region8: #{tpu_custom_call.1} parent=0 // loop_exit
    _

</llo_original>
